<compile_context>
chip_gen: v7x
topology: tpu7x:2x2x1
jax: 0.10.0
libtpu: 0.0.40
codegen_flags: <defaults>
</compile_context>

<pallas_src>
import jax
import jax.numpy as jnp
from jax.experimental import pallas as pl
from jax.experimental.pallas import tpu as pltpu


def _pow(x, g):
    """x ** g for a static python float g (repeated multiply for integer g)."""
    gf = float(g)
    if gf.is_integer() and gf >= 0:
        gi = int(gf)
        if gi == 0:
            return jnp.ones_like(x)
        r = x
        for _ in range(gi - 1):
            r = r * x
        return r
    return jnp.exp(gf * jnp.log(x))


def _make_matcher_kernel(alpha, gamma, w_class, w_bbox, w_giou,
                         inv_xyxy, N, K, T, TN):
    eps_log = 1e-8
    eps_iou = 1e-6  # mmdet bbox_overlaps default eps
    needs_mask = (N % TN) != 0

    def kernel(hm_ref, box_ref, ids_ref, gtb_ref, out_ref, minval_ref, minidx_ref):
        n_idx = pl.program_id(1)

        @pl.when(n_idx == 0)
        def _():
            minval_ref[...] = jnp.full(minval_ref.shape, jnp.inf, minval_ref.dtype)
            minidx_ref[...] = jnp.zeros(minidx_ref.shape, minidx_ref.dtype)

        logits_k = hm_ref[0].astype(jnp.float32)          # (K, TN)
        tgt_ids = ids_ref[0]                              # (T, 1) int32

        # ---- gather logits per target class (exact), then focal math on (T, TN)
        if K <= 32:
            # unrolled compare+select on VPU (tiny K: avoids MXU push/pop latency)
            gathered = jnp.zeros((T, TN), jnp.float32)
            for c in range(K):
                row = logits_k[c:c + 1, :]                # (1, TN)
                gathered = jnp.where(tgt_ids == c, row, gathered)
        else:
            class_iota = jax.lax.broadcasted_iota(jnp.int32, (T, K), 1)
            onehot = (class_iota == jnp.broadcast_to(tgt_ids, (T, K))).astype(jnp.float32)
            gathered = jnp.dot(onehot, logits_k, preferred_element_type=jnp.float32)

        prob = jax.nn.sigmoid(gathered)                   # (T, TN)
        neg_cost = (1.0 - alpha) * _pow(prob, gamma) * (-jnp.log(1.0 - prob + eps_log))
        pos_cost = alpha * _pow(1.0 - prob, gamma) * (-jnp.log(prob + eps_log))
        cost_class = pos_cost - neg_cost                  # (T, TN)

        # ---- box costs -------------------------------------------------------
        boxes = box_ref[0].astype(jnp.float32)            # (4, TN)
        gtb = gtb_ref[0].astype(jnp.float32)              # (T, 4)
        bx = [boxes[c:c + 1, :] for c in range(4)]        # each (1, TN) lane row
        tx = [gtb[:, c:c + 1] for c in range(4)]          # each (T, 1)

        # L1 cdist on image-normalized boxes (normalize once per coordinate)
        cost_bbox = jnp.zeros((T, TN), jnp.float32)
        for c in range(4):
            s = float(inv_xyxy[c])
            cost_bbox = cost_bbox + jnp.abs(bx[c] * s - tx[c] * s)

        # -GIoU (mmdet bbox_overlaps, mode='giou')
        area1 = (bx[2] - bx[0]) * (bx[3] - bx[1])         # (1, TN)
        area2 = (tx[2] - tx[0]) * (tx[3] - tx[1])         # (T, 1)
        iw = jnp.maximum(jnp.minimum(bx[2], tx[2]) - jnp.maximum(bx[0], tx[0]), 0.0)
        ih = jnp.maximum(jnp.minimum(bx[3], tx[3]) - jnp.maximum(bx[1], tx[1]), 0.0)
        overlap = iw * ih                                 # (T, TN)
        union = jnp.maximum(area1 + area2 - overlap, eps_iou)
        ious = overlap / union
        ew = jnp.maximum(jnp.maximum(bx[2], tx[2]) - jnp.minimum(bx[0], tx[0]), 0.0)
        eh = jnp.maximum(jnp.maximum(bx[3], tx[3]) - jnp.minimum(bx[1], tx[1]), 0.0)
        enclose = jnp.maximum(ew * eh, eps_iou)
        giou = ious - (enclose - union) / enclose
        cost_giou = -giou                                 # (T, TN)

        # ---- combine; streaming first-min argmin over the lane (N) axis -------
        C = w_bbox * cost_bbox + w_class * cost_class + w_giou * cost_giou

        lane = jax.lax.broadcasted_iota(jnp.int32, (T, TN), 1) + n_idx * TN
        if needs_mask:
            C = jnp.where(lane < N, C, jnp.inf)

        tile_min = jnp.min(C, axis=-1, keepdims=True)                    # (T, 1)
        masked_idx = jnp.where(C <= tile_min, lane, jnp.int32(N))
        tile_arg = jnp.min(masked_idx, axis=-1, keepdims=True)           # (T, 1)

        # earlier tiles win ties (strict <) -> global first-occurrence argmin
        upd = tile_min < minval_ref[...]
        minval_ref[...] = jnp.where(upd, tile_min, minval_ref[...])
        minidx_ref[...] = jnp.where(upd, tile_arg, minidx_ref[...])

        @pl.when(n_idx == pl.num_programs(1) - 1)
        def _():
            out_ref[0] = minidx_ref[...]

    return kernel


def min_cost_matcher(hm, pred_boxes, gt_labels, gt_bboxes, img_shape,
                     alpha=0.25, gamma=2.0,
                     cost_class=1.0, cost_bbox=1.0, cost_giou=1.0,
                     lane_tile=2048):
    """Pallas implementation of MinCostMatcher.forward.

    hm:          [bs, K, h, w] class logits (NCHW, as in PyTorch)
    pred_boxes:  [bs, 4, h, w] xyxy boxes (NCHW)
    gt_labels:   [bs, T] int class ids (fixed T per image)
    gt_bboxes:   [bs, T, 4] xyxy boxes
    img_shape:   (img_h, img_w) python scalars (static)
    Returns list of (src_ind[int32 T], tgt_ind[int32 T]) per batch element.
    """
    bs, K, h, w = hm.shape
    N = h * w
    T = gt_labels.shape[1]
    img_h, img_w = float(img_shape[0]), float(img_shape[1])
    inv_xyxy = (1.0 / img_w, 1.0 / img_h, 1.0 / img_w, 1.0 / img_h)

    # glue: pure reshapes only (N stays row-major over (h, w); no HBM transposes)
    hm_kn = hm.reshape(bs, K, N).astype(jnp.float32)              # [bs, K, N]
    box_4n = pred_boxes.reshape(bs, 4, N).astype(jnp.float32)     # [bs, 4, N]
    tgt_ids = gt_labels.astype(jnp.int32).reshape(bs, T, 1)       # [bs, T, 1]
    gt_box = gt_bboxes.astype(jnp.float32)                        # [bs, T, 4]

    TN = N if N <= lane_tile else lane_tile
    grid_n = pl.cdiv(N, TN)

    kernel = _make_matcher_kernel(alpha, gamma, cost_class, cost_bbox, cost_giou,
                                  inv_xyxy, N, K, T, TN)

    src_ind = pl.pallas_call(
        kernel,
        out_shape=jax.ShapeDtypeStruct((bs, T, 1), jnp.int32),
        grid_spec=pltpu.PrefetchScalarGridSpec(
            num_scalar_prefetch=0,
            grid=(bs, grid_n),
            in_specs=[
                pl.BlockSpec((1, K, TN), lambda b, n: (b, 0, n)),
                pl.BlockSpec((1, 4, TN), lambda b, n: (b, 0, n)),
                pl.BlockSpec((1, T, 1), lambda b, n: (b, 0, 0)),
                pl.BlockSpec((1, T, 4), lambda b, n: (b, 0, 0)),
            ],
            out_specs=pl.BlockSpec((1, T, 1), lambda b, n: (b, 0, 0)),
            scratch_shapes=[
                pltpu.VMEM((T, 1), jnp.float32),   # running min cost
                pltpu.VMEM((T, 1), jnp.int32),     # running first-min index
            ],
        ),
        compiler_params=pltpu.CompilerParams(
            dimension_semantics=("parallel", "arbitrary")),
    )(hm_kn, box_4n, tgt_ids, gt_box)

    src_ind = src_ind.reshape(bs, T)
    tgt_ind = jnp.broadcast_to(jnp.arange(T, dtype=jnp.int32), (bs, T))
    return [(src_ind[i], tgt_ind[i]) for i in range(bs)]


# ----------------------------- pure-JAX reference -----------------------------
def _reference(hm, pred_boxes, gt_labels, gt_bboxes, img_shape,
               alpha, gamma, wc, wb, wg):
    bs, K, h, w = hm.shape
    N = h * w
    img_h, img_w = float(img_shape[0]), float(img_shape[1])
    img_xyxy = jnp.array([img_w, img_h, img_w, img_h], jnp.float32)
    prob = jax.nn.sigmoid(jnp.transpose(hm, (0, 2, 3, 1)).reshape(bs, N, K))
    boxes = jnp.transpose(pred_boxes, (0, 2, 3, 1)).reshape(bs, N, 4)
    Cs, srcs = [], []
    for i in range(bs):
        p = prob[i]
        ob = boxes[i]
        tgt = gt_labels[i]
        tb = gt_bboxes[i].astype(jnp.float32)
        neg = (1 - alpha) * _pow(p, gamma) * (-jnp.log(1 - p + 1e-8))
        pos = alpha * _pow(1 - p, gamma) * (-jnp.log(p + 1e-8))
        cc = pos[:, tgt] - neg[:, tgt]
        cb = jnp.sum(jnp.abs(ob[:, None, :] / img_xyxy - tb[None, :, :] / img_xyxy), -1)
        area1 = (ob[:, 2] - ob[:, 0]) * (ob[:, 3] - ob[:, 1])
        area2 = (tb[:, 2] - tb[:, 0]) * (tb[:, 3] - tb[:, 1])
        lt = jnp.maximum(ob[:, None, :2], tb[None, :, :2])
        rb = jnp.minimum(ob[:, None, 2:], tb[None, :, 2:])
        whi = jnp.clip(rb - lt, 0.0)
        overlap = whi[..., 0] * whi[..., 1]
        union = jnp.maximum(area1[:, None] + area2[None, :] - overlap, 1e-6)
        ious = overlap / union
        elt = jnp.minimum(ob[:, None, :2], tb[None, :, :2])
        erb = jnp.maximum(ob[:, None, 2:], tb[None, :, 2:])
        ewh = jnp.clip(erb - elt, 0.0)
        enclose = jnp.maximum(ewh[..., 0] * ewh[..., 1], 1e-6)
        giou = ious - (enclose - union) / enclose
        C = wb * cb + wc * cc + wg * (-giou)
        Cs.append(C)
        srcs.append(jnp.argmin(C, axis=0).astype(jnp.int32))
    return jnp.stack(srcs), jnp.stack(Cs)


if __name__ == "__main__":
    # "parameters" of the module (hyperparameters only; MinCostMatcher has no weights)
    ALPHA, GAMMA = 0.25, 2.0
    W_CLASS, W_BBOX, W_GIOU = 1.0, 1.0, 1.0

    bs, K, h, w, T = 2, 4, 16, 16, 8
    img_h, img_w = 64.0, 64.0

    key = jax.random.PRNGKey(0)
    k1, k2, k3, k4, k5, k6 = jax.random.split(key, 6)

    hm = jax.random.normal(k1, (bs, K, h, w), jnp.float32)
    p_xy = jax.random.uniform(k2, (bs, 2, h, w), minval=0.0, maxval=0.6 * img_w)
    p_wh = jax.random.uniform(k3, (bs, 2, h, w), minval=2.0, maxval=0.4 * img_w)
    pred_boxes = jnp.concatenate([p_xy, p_xy + p_wh], axis=1)          # [bs,4,h,w] xyxy
    gt_labels = jax.random.randint(k4, (bs, T), 0, K)
    g_xy = jax.random.uniform(k5, (bs, T, 2), minval=0.0, maxval=0.6 * img_w)
    g_wh = jax.random.uniform(k6, (bs, T, 2), minval=4.0, maxval=0.4 * img_w)
    gt_bboxes = jnp.concatenate([g_xy, g_xy + g_wh], axis=-1)          # [bs,T,4] xyxy
    img_shape = (img_h, img_w)

    out = min_cost_matcher(hm, pred_boxes, gt_labels, gt_bboxes, img_shape,
                           alpha=ALPHA, gamma=GAMMA,
                           cost_class=W_CLASS, cost_bbox=W_BBOX, cost_giou=W_GIOU)
    jax.block_until_ready([x for pair in out for x in pair])

    # correctness check against a pure-JAX reference
    src_pl = jnp.stack([p[0] for p in out])                            # [bs, T]
    src_ref, C_ref = _reference(hm, pred_boxes, gt_labels, gt_bboxes, img_shape,
                                ALPHA, GAMMA, W_CLASS, W_BBOX, W_GIOU)
    if not bool(jnp.all(src_pl == src_ref)):
        # tolerate numerically-tied picks: kernel's chosen cost must equal the min
        t_idx = jnp.arange(T)
        picked = jnp.stack([C_ref[i, src_pl[i], t_idx] for i in range(bs)])
        best = jnp.stack([C_ref[i].min(axis=0) for i in range(bs)])
        assert bool(jnp.all(jnp.abs(picked - best) < 1e-3)), "kernel/reference mismatch"

    print("KERNEL_OK")
</pallas_src>

<mosaic_0001>
module attributes {stable_mosaic.version = 11 : i64} {
  func.func @kernel(%arg0: i32, %arg1: i32, %arg2: memref<1x4x256xf32, #tpu.memory_space<vmem>>, %arg3: memref<1x4x256xf32, #tpu.memory_space<vmem>>, %arg4: memref<1x8x1xi32, #tpu.memory_space<vmem>>, %arg5: memref<1x8x4xf32, #tpu.memory_space<vmem>>, %arg6: memref<1x8x1xi32, #tpu.memory_space<vmem>>, %arg7: memref<8x1xf32, #tpu.memory_space<vmem>>, %arg8: memref<8x1xi32, #tpu.memory_space<vmem>>) attributes {dimension_semantics = [#tpu.dimension_semantics<parallel>, #tpu.dimension_semantics<arbitrary>], iteration_bounds = array<i64: 2, 1>, scalar_prefetch = 0 : i64, scratch_operands = 2 : i64, tpu.core_type = #tpu.core_type<tc>, window_params = [{transform_indices = @transform_0, window_bounds = array<i64: 1, 4, 256>}, {transform_indices = @transform_1, window_bounds = array<i64: 1, 4, 256>}, {transform_indices = @transform_2, window_bounds = array<i64: 1, 8, 1>}, {transform_indices = @transform_3, window_bounds = array<i64: 1, 8, 4>}, {transform_indices = @transform_4, window_bounds = array<i64: 1, 8, 1>}]} {
    %c0_i32 = arith.constant 0 : i32
    %0 = arith.cmpi eq, %arg1, %c0_i32 : i32
    %1 = arith.extui %0 : i1 to i32
    %c0_i32_0 = arith.constant 0 : i32
    %2 = arith.cmpi ne, %1, %c0_i32_0 : i32
    scf.if %2 {
      %cst_56 = arith.constant 0x7F800000 : f32
      %206 = vector.broadcast %cst_56 : f32 to vector<8x1xf32>
      %c0_57 = arith.constant 0 : index
      %c0_58 = arith.constant 0 : index
      %207 = vector.load %arg7[%c0_57, %c0_58] : memref<8x1xf32, #tpu.memory_space<vmem>>, vector<8x1xf32>
      tpu.vector_store %arg7[%c0_57, %c0_58], %206 {strides = array<i32>} : memref<8x1xf32, #tpu.memory_space<vmem>>, vector<8x1xf32>,
      %c0_i32_59 = arith.constant 0 : i32
      %208 = vector.broadcast %c0_i32_59 : i32 to vector<8x1xi32>
      %c0_60 = arith.constant 0 : index
      %c0_61 = arith.constant 0 : index
      %209 = vector.load %arg8[%c0_60, %c0_61] : memref<8x1xi32, #tpu.memory_space<vmem>>, vector<8x1xi32>
      tpu.vector_store %arg8[%c0_60, %c0_61], %208 {strides = array<i32>} : memref<8x1xi32, #tpu.memory_space<vmem>>, vector<8x1xi32>,
    } else {
    }
    %c0 = arith.constant 0 : index
    %c0_1 = arith.constant 0 : index
    %c0_2 = arith.constant 0 : index
    %3 = vector.load %arg2[%c0, %c0_1, %c0_2] : memref<1x4x256xf32, #tpu.memory_space<vmem>>, vector<1x4x256xf32>
    %4 = vector.shape_cast %3 : vector<1x4x256xf32> to vector<4x256xf32>
    %c0_3 = arith.constant 0 : index
    %c0_4 = arith.constant 0 : index
    %c0_5 = arith.constant 0 : index
    %5 = vector.load %arg4[%c0_3, %c0_4, %c0_5] : memref<1x8x1xi32, #tpu.memory_space<vmem>>, vector<1x8x1xi32>
    %6 = vector.shape_cast %5 : vector<1x8x1xi32> to vector<8x1xi32>
    %cst = arith.constant 0.000000e+00 : f32
    %7 = vector.broadcast %cst : f32 to vector<8x256xf32>
    %8 = vector.extract_strided_slice %4 {offsets = [0, 0], sizes = [1, 256], strides = [1, 1]} : vector<4x256xf32> to vector<1x256xf32>
    %c0_i32_6 = arith.constant 0 : i32
    %9 = vector.broadcast %c0_i32_6 : i32 to vector<8x1xi32>
    %10 = arith.cmpi eq, %6, %9 : vector<8x1xi32>
    %11 = vector.shape_cast %10 : vector<8x1xi1> to vector<8x1xi1>
    %12 = vector.broadcast %11 : vector<8x1xi1> to vector<8x256xi1>
    %13 = vector.shape_cast %8 : vector<1x256xf32> to vector<1x256xf32>
    %14 = vector.broadcast %13 : vector<1x256xf32> to vector<8x256xf32>
    %15 = arith.select %12, %14, %7 : vector<8x256xi1>, vector<8x256xf32>
    %16 = vector.extract_strided_slice %4 {offsets = [1, 0], sizes = [1, 256], strides = [1, 1]} : vector<4x256xf32> to vector<1x256xf32>
    %c1_i32 = arith.constant 1 : i32
    %17 = vector.broadcast %c1_i32 : i32 to vector<8x1xi32>
    %18 = arith.cmpi eq, %6, %17 : vector<8x1xi32>
    %19 = vector.shape_cast %18 : vector<8x1xi1> to vector<8x1xi1>
    %20 = vector.broadcast %19 : vector<8x1xi1> to vector<8x256xi1>
    %21 = vector.shape_cast %16 : vector<1x256xf32> to vector<1x256xf32>
    %22 = vector.broadcast %21 : vector<1x256xf32> to vector<8x256xf32>
    %23 = arith.select %20, %22, %15 : vector<8x256xi1>, vector<8x256xf32>
    %24 = vector.extract_strided_slice %4 {offsets = [2, 0], sizes = [1, 256], strides = [1, 1]} : vector<4x256xf32> to vector<1x256xf32>
    %c2_i32 = arith.constant 2 : i32
    %25 = vector.broadcast %c2_i32 : i32 to vector<8x1xi32>
    %26 = arith.cmpi eq, %6, %25 : vector<8x1xi32>
    %27 = vector.shape_cast %26 : vector<8x1xi1> to vector<8x1xi1>
    %28 = vector.broadcast %27 : vector<8x1xi1> to vector<8x256xi1>
    %29 = vector.shape_cast %24 : vector<1x256xf32> to vector<1x256xf32>
    %30 = vector.broadcast %29 : vector<1x256xf32> to vector<8x256xf32>
    %31 = arith.select %28, %30, %23 : vector<8x256xi1>, vector<8x256xf32>
    %32 = vector.extract_strided_slice %4 {offsets = [3, 0], sizes = [1, 256], strides = [1, 1]} : vector<4x256xf32> to vector<1x256xf32>
    %c3_i32 = arith.constant 3 : i32
    %33 = vector.broadcast %c3_i32 : i32 to vector<8x1xi32>
    %34 = arith.cmpi eq, %6, %33 : vector<8x1xi32>
    %35 = vector.shape_cast %34 : vector<8x1xi1> to vector<8x1xi1>
    %36 = vector.broadcast %35 : vector<8x1xi1> to vector<8x256xi1>
    %37 = vector.shape_cast %32 : vector<1x256xf32> to vector<1x256xf32>
    %38 = vector.broadcast %37 : vector<1x256xf32> to vector<8x256xf32>
    %39 = arith.select %36, %38, %31 : vector<8x256xi1>, vector<8x256xf32>
    %40 = arith.negf %39 : vector<8x256xf32>
    %41 = math.exp %40 : vector<8x256xf32>
    %cst_7 = arith.constant 1.000000e+00 : f32
    %42 = vector.broadcast %cst_7 : f32 to vector<8x256xf32>
    %43 = arith.addf %42, %41 : vector<8x256xf32>
    %44 = arith.divf %42, %43 : vector<8x256xf32>
    %45 = arith.mulf %44, %44 : vector<8x256xf32>
    %cst_8 = arith.constant 7.500000e-01 : f32
    %46 = vector.broadcast %cst_8 : f32 to vector<8x256xf32>
    %47 = arith.mulf %46, %45 : vector<8x256xf32>
    %cst_9 = arith.constant 1.000000e+00 : f32
    %48 = vector.broadcast %cst_9 : f32 to vector<8x256xf32>
    %49 = arith.subf %48, %44 : vector<8x256xf32>
    %cst_10 = arith.constant 9.99999993E-9 : f32
    %50 = vector.broadcast %cst_10 : f32 to vector<8x256xf32>
    %51 = arith.addf %49, %50 : vector<8x256xf32>
    %52 = math.log %51 : vector<8x256xf32>
    %cst_11 = arith.constant 0.000000e+00 : f32
    %53 = vector.broadcast %cst_11 : f32 to vector<8x256xf32>
    %54 = arith.subf %53, %52 : vector<8x256xf32>
    %55 = arith.mulf %47, %54 : vector<8x256xf32>
    %cst_12 = arith.constant 1.000000e+00 : f32
    %56 = vector.broadcast %cst_12 : f32 to vector<8x256xf32>
    %57 = arith.subf %56, %44 : vector<8x256xf32>
    %58 = arith.mulf %57, %57 : vector<8x256xf32>
    %cst_13 = arith.constant 2.500000e-01 : f32
    %59 = vector.broadcast %cst_13 : f32 to vector<8x256xf32>
    %60 = arith.mulf %59, %58 : vector<8x256xf32>
    %cst_14 = arith.constant 9.99999993E-9 : f32
    %61 = vector.broadcast %cst_14 : f32 to vector<8x256xf32>
    %62 = arith.addf %44, %61 : vector<8x256xf32>
    %63 = math.log %62 : vector<8x256xf32>
    %cst_15 = arith.constant 0.000000e+00 : f32
    %64 = vector.broadcast %cst_15 : f32 to vector<8x256xf32>
    %65 = arith.subf %64, %63 : vector<8x256xf32>
    %66 = arith.mulf %60, %65 : vector<8x256xf32>
    %67 = arith.subf %66, %55 : vector<8x256xf32>
    %c0_16 = arith.constant 0 : index
    %c0_17 = arith.constant 0 : index
    %c0_18 = arith.constant 0 : index
    %68 = vector.load %arg3[%c0_16, %c0_17, %c0_18] : memref<1x4x256xf32, #tpu.memory_space<vmem>>, vector<1x4x256xf32>
    %69 = vector.shape_cast %68 : vector<1x4x256xf32> to vector<4x256xf32>
    %c0_19 = arith.constant 0 : index
    %c0_20 = arith.constant 0 : index
    %c0_21 = arith.constant 0 : index
    %70 = vector.load %arg5[%c0_19, %c0_20, %c0_21] : memref<1x8x4xf32, #tpu.memory_space<vmem>>, vector<1x8x4xf32>
    %71 = vector.shape_cast %70 : vector<1x8x4xf32> to vector<8x4xf32>
    %72 = vector.extract_strided_slice %69 {offsets = [0, 0], sizes = [1, 256], strides = [1, 1]} : vector<4x256xf32> to vector<1x256xf32>
    %73 = vector.extract_strided_slice %69 {offsets = [1, 0], sizes = [1, 256], strides = [1, 1]} : vector<4x256xf32> to vector<1x256xf32>
    %74 = vector.extract_strided_slice %69 {offsets = [2, 0], sizes = [1, 256], strides = [1, 1]} : vector<4x256xf32> to vector<1x256xf32>
    %75 = vector.extract_strided_slice %69 {offsets = [3, 0], sizes = [1, 256], strides = [1, 1]} : vector<4x256xf32> to vector<1x256xf32>
    %76 = vector.extract_strided_slice %71 {offsets = [0, 0], sizes = [8, 1], strides = [1, 1]} : vector<8x4xf32> to vector<8x1xf32>
    %77 = vector.extract_strided_slice %71 {offsets = [0, 1], sizes = [8, 1], strides = [1, 1]} : vector<8x4xf32> to vector<8x1xf32>
    %78 = vector.extract_strided_slice %71 {offsets = [0, 2], sizes = [8, 1], strides = [1, 1]} : vector<8x4xf32> to vector<8x1xf32>
    %79 = vector.extract_strided_slice %71 {offsets = [0, 3], sizes = [8, 1], strides = [1, 1]} : vector<8x4xf32> to vector<8x1xf32>
    %cst_22 = arith.constant 0.000000e+00 : f32
    %80 = vector.broadcast %cst_22 : f32 to vector<8x256xf32>
    %cst_23 = arith.constant 1.562500e-02 : f32
    %81 = vector.broadcast %cst_23 : f32 to vector<1x256xf32>
    %82 = arith.mulf %72, %81 : vector<1x256xf32>
    %cst_24 = arith.constant 1.562500e-02 : f32
    %83 = vector.broadcast %cst_24 : f32 to vector<8x1xf32>
    %84 = arith.mulf %76, %83 : vector<8x1xf32>
    %85 = vector.broadcast %82 : vector<1x256xf32> to vector<8x256xf32>
    %86 = vector.broadcast %84 : vector<8x1xf32> to vector<8x256xf32>
    %87 = arith.subf %85, %86 : vector<8x256xf32>
    %88 = math.absf %87 : vector<8x256xf32>
    %89 = arith.addf %80, %88 : vector<8x256xf32>
    %cst_25 = arith.constant 1.562500e-02 : f32
    %90 = vector.broadcast %cst_25 : f32 to vector<1x256xf32>
    %91 = arith.mulf %73, %90 : vector<1x256xf32>
    %cst_26 = arith.constant 1.562500e-02 : f32
    %92 = vector.broadcast %cst_26 : f32 to vector<8x1xf32>
    %93 = arith.mulf %77, %92 : vector<8x1xf32>
    %94 = vector.broadcast %91 : vector<1x256xf32> to vector<8x256xf32>
    %95 = vector.broadcast %93 : vector<8x1xf32> to vector<8x256xf32>
    %96 = arith.subf %94, %95 : vector<8x256xf32>
    %97 = math.absf %96 : vector<8x256xf32>
    %98 = arith.addf %89, %97 : vector<8x256xf32>
    %cst_27 = arith.constant 1.562500e-02 : f32
    %99 = vector.broadcast %cst_27 : f32 to vector<1x256xf32>
    %100 = arith.mulf %74, %99 : vector<1x256xf32>
    %cst_28 = arith.constant 1.562500e-02 : f32
    %101 = vector.broadcast %cst_28 : f32 to vector<8x1xf32>
    %102 = arith.mulf %78, %101 : vector<8x1xf32>
    %103 = vector.broadcast %100 : vector<1x256xf32> to vector<8x256xf32>
    %104 = vector.broadcast %102 : vector<8x1xf32> to vector<8x256xf32>
    %105 = arith.subf %103, %104 : vector<8x256xf32>
    %106 = math.absf %105 : vector<8x256xf32>
    %107 = arith.addf %98, %106 : vector<8x256xf32>
    %cst_29 = arith.constant 1.562500e-02 : f32
    %108 = vector.broadcast %cst_29 : f32 to vector<1x256xf32>
    %109 = arith.mulf %75, %108 : vector<1x256xf32>
    %cst_30 = arith.constant 1.562500e-02 : f32
    %110 = vector.broadcast %cst_30 : f32 to vector<8x1xf32>
    %111 = arith.mulf %79, %110 : vector<8x1xf32>
    %112 = vector.broadcast %109 : vector<1x256xf32> to vector<8x256xf32>
    %113 = vector.broadcast %111 : vector<8x1xf32> to vector<8x256xf32>
    %114 = arith.subf %112, %113 : vector<8x256xf32>
    %115 = math.absf %114 : vector<8x256xf32>
    %116 = arith.addf %107, %115 : vector<8x256xf32>
    %117 = arith.subf %74, %72 : vector<1x256xf32>
    %118 = arith.subf %75, %73 : vector<1x256xf32>
    %119 = arith.mulf %117, %118 : vector<1x256xf32>
    %120 = arith.subf %78, %76 : vector<8x1xf32>
    %121 = arith.subf %79, %77 : vector<8x1xf32>
    %122 = arith.mulf %120, %121 : vector<8x1xf32>
    %123 = vector.broadcast %74 : vector<1x256xf32> to vector<8x256xf32>
    %124 = vector.broadcast %78 : vector<8x1xf32> to vector<8x256xf32>
    %125 = arith.minimumf %123, %124 : vector<8x256xf32>
    %126 = vector.broadcast %72 : vector<1x256xf32> to vector<8x256xf32>
    %127 = vector.broadcast %76 : vector<8x1xf32> to vector<8x256xf32>
    %128 = arith.maximumf %126, %127 : vector<8x256xf32>
    %129 = arith.subf %125, %128 : vector<8x256xf32>
    %cst_31 = arith.constant 0.000000e+00 : f32
    %130 = vector.broadcast %cst_31 : f32 to vector<8x256xf32>
    %131 = arith.maximumf %129, %130 : vector<8x256xf32>
    %132 = vector.broadcast %75 : vector<1x256xf32> to vector<8x256xf32>
    %133 = vector.broadcast %79 : vector<8x1xf32> to vector<8x256xf32>
    %134 = arith.minimumf %132, %133 : vector<8x256xf32>
    %135 = vector.broadcast %73 : vector<1x256xf32> to vector<8x256xf32>
    %136 = vector.broadcast %77 : vector<8x1xf32> to vector<8x256xf32>
    %137 = arith.maximumf %135, %136 : vector<8x256xf32>
    %138 = arith.subf %134, %137 : vector<8x256xf32>
    %cst_32 = arith.constant 0.000000e+00 : f32
    %139 = vector.broadcast %cst_32 : f32 to vector<8x256xf32>
    %140 = arith.maximumf %138, %139 : vector<8x256xf32>
    %141 = arith.mulf %131, %140 : vector<8x256xf32>
    %142 = vector.broadcast %119 : vector<1x256xf32> to vector<8x256xf32>
    %143 = vector.broadcast %122 : vector<8x1xf32> to vector<8x256xf32>
    %144 = arith.addf %142, %143 : vector<8x256xf32>
    %145 = arith.subf %144, %141 : vector<8x256xf32>
    %cst_33 = arith.constant 9.99999997E-7 : f32
    %146 = vector.broadcast %cst_33 : f32 to vector<8x256xf32>
    %147 = arith.maximumf %145, %146 : vector<8x256xf32>
    %148 = arith.divf %141, %147 : vector<8x256xf32>
    %149 = vector.broadcast %74 : vector<1x256xf32> to vector<8x256xf32>
    %150 = vector.broadcast %78 : vector<8x1xf32> to vector<8x256xf32>
    %151 = arith.maximumf %149, %150 : vector<8x256xf32>
    %152 = vector.broadcast %72 : vector<1x256xf32> to vector<8x256xf32>
    %153 = vector.broadcast %76 : vector<8x1xf32> to vector<8x256xf32>
    %154 = arith.minimumf %152, %153 : vector<8x256xf32>
    %155 = arith.subf %151, %154 : vector<8x256xf32>
    %cst_34 = arith.constant 0.000000e+00 : f32
    %156 = vector.broadcast %cst_34 : f32 to vector<8x256xf32>
    %157 = arith.maximumf %155, %156 : vector<8x256xf32>
    %158 = vector.broadcast %75 : vector<1x256xf32> to vector<8x256xf32>
    %159 = vector.broadcast %79 : vector<8x1xf32> to vector<8x256xf32>
    %160 = arith.maximumf %158, %159 : vector<8x256xf32>
    %161 = vector.broadcast %73 : vector<1x256xf32> to vector<8x256xf32>
    %162 = vector.broadcast %77 : vector<8x1xf32> to vector<8x256xf32>
    %163 = arith.minimumf %161, %162 : vector<8x256xf32>
    %164 = arith.subf %160, %163 : vector<8x256xf32>
    %cst_35 = arith.constant 0.000000e+00 : f32
    %165 = vector.broadcast %cst_35 : f32 to vector<8x256xf32>
    %166 = arith.maximumf %164, %165 : vector<8x256xf32>
    %167 = arith.mulf %157, %166 : vector<8x256xf32>
    %cst_36 = arith.constant 9.99999997E-7 : f32
    %168 = vector.broadcast %cst_36 : f32 to vector<8x256xf32>
    %169 = arith.maximumf %167, %168 : vector<8x256xf32>
    %170 = arith.subf %169, %147 : vector<8x256xf32>
    %171 = arith.divf %170, %169 : vector<8x256xf32>
    %172 = arith.subf %148, %171 : vector<8x256xf32>
    %cst_37 = arith.constant 0.000000e+00 : f32
    %173 = vector.broadcast %cst_37 : f32 to vector<8x256xf32>
    %174 = arith.subf %173, %172 : vector<8x256xf32>
    %cst_38 = arith.constant 1.000000e+00 : f32
    %175 = vector.broadcast %cst_38 : f32 to vector<8x256xf32>
    %176 = arith.mulf %175, %116 : vector<8x256xf32>
    %cst_39 = arith.constant 1.000000e+00 : f32
    %177 = vector.broadcast %cst_39 : f32 to vector<8x256xf32>
    %178 = arith.mulf %177, %67 : vector<8x256xf32>
    %179 = arith.addf %176, %178 : vector<8x256xf32>
    %cst_40 = arith.constant 1.000000e+00 : f32
    %180 = vector.broadcast %cst_40 : f32 to vector<8x256xf32>
    %181 = arith.mulf %180, %174 : vector<8x256xf32>
    %182 = arith.addf %179, %181 : vector<8x256xf32>
    %183 = tpu.iota {dimensions = array<i32: 1>} : vector<8x256xi32>
    %c256_i32 = arith.constant 256 : i32
    %184 = arith.muli %arg1, %c256_i32 : i32
    %185 = vector.broadcast %184 : i32 to vector<8x256xi32>
    %186 = arith.addi %183, %185 : vector<8x256xi32>
    %cst_41 = arith.constant dense<0x7F800000> : vector<8xf32>
    %187 = vector.multi_reduction <minimumf>, %182, %cst_41 [1] : vector<8x256xf32> to vector<8xf32>
    %188 = vector.shape_cast %187 : vector<8xf32> to vector<8x1xf32>
    %189 = vector.broadcast %188 : vector<8x1xf32> to vector<8x256xf32>
    %190 = arith.cmpf ole, %182, %189 : vector<8x256xf32>
    %c256_i32_42 = arith.constant 256 : i32
    %191 = vector.broadcast %c256_i32_42 : i32 to vector<8x256xi32>
    %192 = arith.select %190, %186, %191 : vector<8x256xi1>, vector<8x256xi32>
    %cst_43 = arith.constant dense<2147483647> : vector<8xi32>
    %193 = vector.multi_reduction <minsi>, %192, %cst_43 [1] : vector<8x256xi32> to vector<8xi32>
    %194 = vector.shape_cast %193 : vector<8xi32> to vector<8x1xi32>
    %c0_44 = arith.constant 0 : index
    %c0_45 = arith.constant 0 : index
    %195 = vector.load %arg7[%c0_44, %c0_45] : memref<8x1xf32, #tpu.memory_space<vmem>>, vector<8x1xf32>
    %196 = arith.cmpf olt, %188, %195 : vector<8x1xf32>
    %c0_46 = arith.constant 0 : index
    %c0_47 = arith.constant 0 : index
    %197 = vector.load %arg7[%c0_46, %c0_47] : memref<8x1xf32, #tpu.memory_space<vmem>>, vector<8x1xf32>
    %198 = arith.select %196, %188, %197 : vector<8x1xi1>, vector<8x1xf32>
    %c0_48 = arith.constant 0 : index
    %c0_49 = arith.constant 0 : index
    %199 = vector.load %arg7[%c0_48, %c0_49] : memref<8x1xf32, #tpu.memory_space<vmem>>, vector<8x1xf32>
    tpu.vector_store %arg7[%c0_48, %c0_49], %198 {strides = array<i32>} : memref<8x1xf32, #tpu.memory_space<vmem>>, vector<8x1xf32>,
    %c0_50 = arith.constant 0 : index
    %c0_51 = arith.constant 0 : index
    %200 = vector.load %arg8[%c0_50, %c0_51] : memref<8x1xi32, #tpu.memory_space<vmem>>, vector<8x1xi32>
    %201 = arith.select %196, %194, %200 : vector<8x1xi1>, vector<8x1xi32>
    %c0_52 = arith.constant 0 : index
    %c0_53 = arith.constant 0 : index
    %202 = vector.load %arg8[%c0_52, %c0_53] : memref<8x1xi32, #tpu.memory_space<vmem>>, vector<8x1xi32>
    tpu.vector_store %arg8[%c0_52, %c0_53], %201 {strides = array<i32>} : memref<8x1xi32, #tpu.memory_space<vmem>>, vector<8x1xi32>,
    %c0_i32_54 = arith.constant 0 : i32
    %203 = arith.cmpi eq, %arg1, %c0_i32_54 : i32
    %204 = arith.extui %203 : i1 to i32
    %c0_i32_55 = arith.constant 0 : i32
    %205 = arith.cmpi ne, %204, %c0_i32_55 : i32
    scf.if %205 {
      %c0_56 = arith.constant 0 : index
      %c0_57 = arith.constant 0 : index
      %206 = vector.load %arg8[%c0_56, %c0_57] : memref<8x1xi32, #tpu.memory_space<vmem>>, vector<8x1xi32>
      %c0_58 = arith.constant 0 : index
      %c0_59 = arith.constant 0 : index
      %c0_60 = arith.constant 0 : index
      %207 = vector.load %arg6[%c0_58, %c0_59, %c0_60] : memref<1x8x1xi32, #tpu.memory_space<vmem>>, vector<1x8x1xi32>
      %208 = vector.shape_cast %207 : vector<1x8x1xi32> to vector<8x1xi32>
      %209 = vector.shape_cast %206 : vector<8x1xi32> to vector<1x8x1xi32>
      tpu.vector_store %arg6[%c0_58, %c0_59, %c0_60], %209 {strides = array<i32>} : memref<1x8x1xi32, #tpu.memory_space<vmem>>, vector<1x8x1xi32>,
    } else {
    }
    return
  }
  func.func @transform_0(%arg0: i32, %arg1: i32) -> (i32, i32, i32) {
    %c0_i32 = arith.constant 0 : i32
    %c0_i32_0 = arith.constant 0 : i32
    return %arg0, %c0_i32, %arg1 : i32, i32, i32
  }
  func.func @transform_1(%arg0: i32, %arg1: i32) -> (i32, i32, i32) {
    %c0_i32 = arith.constant 0 : i32
    %c0_i32_0 = arith.constant 0 : i32
    return %arg0, %c0_i32, %arg1 : i32, i32, i32
  }
  func.func @transform_2(%arg0: i32, %arg1: i32) -> (i32, i32, i32) {
    %c0_i32 = arith.constant 0 : i32
    %c0_i32_0 = arith.constant 0 : i32
    %c0_i32_1 = arith.constant 0 : i32
    return %arg0, %c0_i32, %c0_i32_0 : i32, i32, i32
  }
  func.func @transform_3(%arg0: i32, %arg1: i32) -> (i32, i32, i32) {
    %c0_i32 = arith.constant 0 : i32
    %c0_i32_0 = arith.constant 0 : i32
    %c0_i32_1 = arith.constant 0 : i32
    return %arg0, %c0_i32, %c0_i32_0 : i32, i32, i32
  }
  func.func @transform_4(%arg0: i32, %arg1: i32) -> (i32, i32, i32) {
    %c0_i32 = arith.constant 0 : i32
    %c0_i32_0 = arith.constant 0 : i32
    %c0_i32_1 = arith.constant 0 : i32
    return %arg0, %c0_i32, %c0_i32_0 : i32, i32, i32
  }
}

</mosaic_0001>

<llo_original>
// kernel: tpu_custom_call.1
$region0: #{tpu_custom_call.1}
  #allocation0 [shape = 'u32[]', space=smem, size = 0x4, offset = 0x4, fixed_abs, tag = 'smem constant byte address 0x4 - core index']
  #allocation1 [shape = 'u32[144,128]{1,0:T(1,128)}', space=vmem, size = 0x12000, scoped, tag = 'internal scratch']
  #allocation2 [shape = 'f32[8,1]{1,0:T(8,128)}', space=vmem, size = 0x1000, scoped, tag = 'scratch operand']
  #allocation3 [shape = 's32[8,1]{1,0:T(8,128)}', space=vmem, size = 0x1000, scoped, tag = 'scratch operand']
  %s0 = inlined_call_operand.vmem [shape: f32[2,4,256], index: 0, kind: input, shape index: {}]
  %s1 = inlined_call_operand.vmem [shape: f32[2,4,256], index: 1, kind: input, shape index: {}]
  %s2 = inlined_call_operand.vmem [shape: s32[2,8,1], index: 2, kind: input, shape index: {}]
  %s3 = inlined_call_operand.vmem [shape: f32[2,8,4], index: 3, kind: input, shape index: {}]
  %s4 = inlined_call_operand.vmem [shape: s32[2,8,1], index: 4, kind: output, shape index: {}]
  %s5 = sld [smem:[#allocation0]]
  $region57: #{tpu_custom_call.1} parent=0
    _
  %s7 = ssub.s32 1, %s5
  %s8 = scalar_select 0, %s7, %s5
  loop: start=0, step=1, limit=4
  $region2: #{tpu_custom_call.1} parent=0 // loop_pre_header
    _
  $region3: #{tpu_custom_call.1} parent=0 // loop_header
    %s10 = sphi 0, %s14
    %p11 = scmp.ge.s32.totalorder %s10, 4
    %s17 = sphi 0, %s29
    %s18 = sphi 0, %s25
    %s19 = sphi 0, %s17
    %s20 = sphi 0, %s18
    %s21 = sphi 0, %s19
    %s22 = sphi 0, %s20
    %s34 = sphi 0, %s36
    %s37 = sphi 0, %s34
    %s38 = sphi 0, %s37
    %s54 = sphi 0, %s38
    %s62 = sphi 0, %s64
    %s65 = sphi 0, %s62
    %s66 = sphi 0, %s65
    %s82 = sphi 0, %s66
    %s88 = sphi 0, %s90
    %s91 = sphi 0, %s88
    %s92 = sphi 0, %s91
    %s108 = sphi 0, %s92
    %s114 = sphi 0, %s116
    %s117 = sphi 0, %s114
    %s118 = sphi 0, %s117
    %s134 = sphi 0, %s118
    %s140 = sphi 0, %s142
    %s143 = sphi 0, %s140
    %s144 = sphi 0, %s143
    %s160 = sphi 0, %s144
  $region4: #{tpu_custom_call.1} parent=0 // loop_header_branch
    %13 = sbr.rel (%p11) target = $region8
  $region5: #{tpu_custom_call.1} parent=0 // loop_body
    %s15 = ssub.s32 %s10, 1
    %s16 = ssub.s32 %s10, 2
    %s23 = sadd.s32 1, %s18
    %p24 = scmp.ge.s32.totalorder %s23, 1
    %s25 = scalar_select %p24, 0, %s23
    %s26 = sadd.s32 1, %s17
    %s27 = scalar_select %p24, %s26, %s17
    %p28 = scmp.ge.s32.totalorder %s27, 2
    %s29 = scalar_select %p28, 0, %s27
    %s30 = ssub.s32 %s17, %s29
    %s31 = ssub.s32 %s18, %s25
    %s32 = sor.u32 %s30, %s31
    %p33 = scmp.eq.s32.totalorder %s32, 0
    %s35 = sadd.s32 %s34, 1
    %s36 = scalar_select %p33, %s34, %s35
    %p39 = pneg %p33
    %p40 = scmp.eq.s32.totalorder %s10, 1
    %p41 = por %p39, %p40
    %p42 = scmp.ne.s32.totalorder %s34, %s37
    %p43 = scmp.eq.s32.totalorder %s10, 0
    %p44 = por %p42, %p43
    %p45 = scmp.ne.s32.totalorder %s34, %s37
    %p46 = scmp.eq.s32.totalorder %s15, 1
    %p47 = por %p45, %p46
    %p48 = scmp.ne.s32.totalorder %s37, %s38
    %p49 = scmp.eq.s32.totalorder %s15, 0
    %p50 = por %p48, %p49
    %p51 = scmp.ne.s32.totalorder %s37, %s38
    %p52 = scmp.eq.s32.totalorder %s16, 1
    %p53 = por %p51, %p52
    %p55 = scmp.ne.s32.totalorder %s38, %s54
    %p56 = scmp.eq.s32.totalorder %s16, 0
    %p57 = por %p55, %p56
    %s58 = ssub.s32 %s17, %s29
    %s59 = ssub.s32 %s18, %s25
    %s60 = sor.u32 %s58, %s59
    %p61 = scmp.eq.s32.totalorder %s60, 0
    %s63 = sadd.s32 %s62, 1
    %s64 = scalar_select %p61, %s62, %s63
    %p67 = pneg %p61
    %p68 = scmp.eq.s32.totalorder %s10, 1
    %p69 = por %p67, %p68
    %p70 = scmp.ne.s32.totalorder %s62, %s65
    %p71 = scmp.eq.s32.totalorder %s10, 0
    %p72 = por %p70, %p71
    %p73 = scmp.ne.s32.totalorder %s62, %s65
    %p74 = scmp.eq.s32.totalorder %s15, 1
    %p75 = por %p73, %p74
    %p76 = scmp.ne.s32.totalorder %s65, %s66
    %p77 = scmp.eq.s32.totalorder %s15, 0
    %p78 = por %p76, %p77
    %p79 = scmp.ne.s32.totalorder %s65, %s66
    %p80 = scmp.eq.s32.totalorder %s16, 1
    %p81 = por %p79, %p80
    %p83 = scmp.ne.s32.totalorder %s66, %s82
    %p84 = scmp.eq.s32.totalorder %s16, 0
    %p85 = por %p83, %p84
    %s86 = ssub.s32 %s17, %s29
    %p87 = scmp.eq.s32.totalorder %s86, 0
    %s89 = sadd.s32 %s88, 1
    %s90 = scalar_select %p87, %s88, %s89
    %p93 = pneg %p87
    %p94 = scmp.eq.s32.totalorder %s10, 1
    %p95 = por %p93, %p94
    %p96 = scmp.ne.s32.totalorder %s88, %s91
    %p97 = scmp.eq.s32.totalorder %s10, 0
    %p98 = por %p96, %p97
    %p99 = scmp.ne.s32.totalorder %s88, %s91
    %p100 = scmp.eq.s32.totalorder %s15, 1
    %p101 = por %p99, %p100
    %p102 = scmp.ne.s32.totalorder %s91, %s92
    %p103 = scmp.eq.s32.totalorder %s15, 0
    %p104 = por %p102, %p103
    %p105 = scmp.ne.s32.totalorder %s91, %s92
    %p106 = scmp.eq.s32.totalorder %s16, 1
    %p107 = por %p105, %p106
    %p109 = scmp.ne.s32.totalorder %s92, %s108
    %p110 = scmp.eq.s32.totalorder %s16, 0
    %p111 = por %p109, %p110
    %s112 = ssub.s32 %s17, %s29
    %p113 = scmp.eq.s32.totalorder %s112, 0
    %s115 = sadd.s32 %s114, 1
    %s116 = scalar_select %p113, %s114, %s115
    %p119 = pneg %p113
    %p120 = scmp.eq.s32.totalorder %s10, 1
    %p121 = por %p119, %p120
    %p122 = scmp.ne.s32.totalorder %s114, %s117
    %p123 = scmp.eq.s32.totalorder %s10, 0
    %p124 = por %p122, %p123
    %p125 = scmp.ne.s32.totalorder %s114, %s117
    %p126 = scmp.eq.s32.totalorder %s15, 1
    %p127 = por %p125, %p126
    %p128 = scmp.ne.s32.totalorder %s117, %s118
    %p129 = scmp.eq.s32.totalorder %s15, 0
    %p130 = por %p128, %p129
    %p131 = scmp.ne.s32.totalorder %s117, %s118
    %p132 = scmp.eq.s32.totalorder %s16, 1
    %p133 = por %p131, %p132
    %p135 = scmp.ne.s32.totalorder %s118, %s134
    %p136 = scmp.eq.s32.totalorder %s16, 0
    %p137 = por %p135, %p136
    %s138 = ssub.s32 %s17, %s29
    %p139 = scmp.eq.s32.totalorder %s138, 0
    %s141 = sadd.s32 %s140, 1
    %s142 = scalar_select %p139, %s140, %s141
    %p145 = pneg %p139
    %p146 = scmp.eq.s32.totalorder %s10, 1
    %p147 = por %p145, %p146
    %p148 = scmp.ne.s32.totalorder %s140, %s143
    %p149 = scmp.eq.s32.totalorder %s10, 0
    %p150 = por %p148, %p149
    %p151 = scmp.ne.s32.totalorder %s140, %s143
    %p152 = scmp.eq.s32.totalorder %s15, 1
    %p153 = por %p151, %p152
    %p154 = scmp.ne.s32.totalorder %s143, %s144
    %p155 = scmp.eq.s32.totalorder %s15, 0
    %p156 = por %p154, %p155
    %p157 = scmp.ne.s32.totalorder %s143, %s144
    %p158 = scmp.eq.s32.totalorder %s16, 1
    %p159 = por %p157, %p158
    %p161 = scmp.ne.s32.totalorder %s144, %s160
    %p162 = scmp.eq.s32.totalorder %s16, 0
    %p163 = por %p161, %p162
    %p164 = scmp.le.s32.totalorder 1, %s10
    %p165 = scmp.lt.s32.totalorder %s10, 3
    %p166 = pnand %p164, %p165
    %p167 = pneg %p166
    // Predicated region
    $region9: #{tpu_custom_call.1} parent=5 // pred_check
      _
    $region10: #{tpu_custom_call.1} parent=5 // pred_check_branch
      %169 = sbr.rel (%p166) target = $region12
    $region11: #{tpu_custom_call.1} parent=5 // pred_region
      %s170 = ssub.s32 %s10, 1
    $region12: #{tpu_custom_call.1} parent=5 // pred_fallthru
      _
    %p171 = scmp.lt.s32.totalorder %s10, 2
    // Predicated region
    $region13: #{tpu_custom_call.1} parent=5 // pred_check
      %p172 = pneg %p171
    $region14: #{tpu_custom_call.1} parent=5 // pred_check_branch
      %174 = sbr.rel (%p172) target = $region16
    $region15: #{tpu_custom_call.1} parent=5 // pred_region
      // Predicated region
      $region17: #{tpu_custom_call.1} parent=15 // pred_check
        %p175 = pneg %p44
      $region18: #{tpu_custom_call.1} parent=15 // pred_check_branch
        %177 = sbr.rel (%p175) target = $region20
      $region19: #{tpu_custom_call.1} parent=15 // pred_region
        %s178 = smul.u32 2, %s18
        %p179 = scmp.lt.s32.totalorder %s17, 1
        %s180 = scalar_select %p179, %s17, 1
        %p181 = scmp.lt.s32.totalorder %s178, 1
        %s182 = scalar_select %p181, %s178, 1
        %s183 = smul.addr %s180, 2
        %s184 = sadd.s32 %s182, %s183
        %s185 = smul.addr %s184, 4
        %s186 = scalar_lea.vmem %s0, %s185
        %s187 = smul.u32 2, %s18
      $region20: #{tpu_custom_call.1} parent=15 // pred_fallthru
        _
      // Predicated region
      $region21: #{tpu_custom_call.1} parent=15 // pred_check
        %p188 = pneg %p72
      $region22: #{tpu_custom_call.1} parent=15 // pred_check_branch
        %190 = sbr.rel (%p188) target = $region24
      $region23: #{tpu_custom_call.1} parent=15 // pred_region
        %s191 = smul.u32 2, %s18
        %p192 = scmp.lt.s32.totalorder %s17, 1
        %s193 = scalar_select %p192, %s17, 1
        %p194 = scmp.lt.s32.totalorder %s191, 1
        %s195 = scalar_select %p194, %s191, 1
        %s196 = smul.addr %s193, 2
        %s197 = sadd.s32 %s195, %s196
        %s198 = smul.addr %s197, 4
        %s199 = scalar_lea.vmem %s1, %s198
        %s200 = smul.u32 2, %s18
      $region24: #{tpu_custom_call.1} parent=15 // pred_fallthru
        _
      // Predicated region
      $region25: #{tpu_custom_call.1} parent=15 // pred_check
        %p201 = pneg %p98
      $region26: #{tpu_custom_call.1} parent=15 // pred_check_branch
        %203 = sbr.rel (%p201) target = $region28
      $region27: #{tpu_custom_call.1} parent=15 // pred_region
        %p204 = scmp.lt.s32.totalorder %s17, 1
        %s205 = scalar_select %p204, %s17, 1
        %s206 = smul.addr %s205, 8
        %s207 = scalar_lea.vmem %s2, %s206
      $region28: #{tpu_custom_call.1} parent=15 // pred_fallthru
        _
      // Predicated region
      $region29: #{tpu_custom_call.1} parent=15 // pred_check
        %p208 = pneg %p124
      $region30: #{tpu_custom_call.1} parent=15 // pred_check_branch
        %210 = sbr.rel (%p208) target = $region32
      $region31: #{tpu_custom_call.1} parent=15 // pred_region
        %p211 = scmp.lt.s32.totalorder %s17, 1
        %s212 = scalar_select %p211, %s17, 1
        %s213 = smul.addr %s212, 8
        %s214 = scalar_lea.vmem %s3, %s213
      $region32: #{tpu_custom_call.1} parent=15 // pred_fallthru
        _
    $region16: #{tpu_custom_call.1} parent=5 // pred_fallthru
      _
    %p215 = scmp.le.s32.totalorder 1, %s10
    %p216 = scmp.lt.s32.totalorder %s10, 3
    %p217 = pnand %p215, %p216
    %p218 = pneg %p217
    // Predicated region
    $region33: #{tpu_custom_call.1} parent=5 // pred_check
      _
    $region34: #{tpu_custom_call.1} parent=5 // pred_check_branch
      %220 = sbr.rel (%p217) target = $region36
    $region35: #{tpu_custom_call.1} parent=5 // pred_region
      %s221 = ssub.s32 %s10, 1
      %s222 = smul.u32 2, %s20
      %p223 = scmp.lt.s32.totalorder %s19, 1
      %s224 = scalar_select %p223, %s19, 1
      %p225 = scmp.lt.s32.totalorder %s222, 1
      %s226 = scalar_select %p225, %s222, 1
      %s227 = smul.addr %s224, 2
      %s228 = sadd.s32 %s226, %s227
      %s229 = smul.addr %s228, 4
      %s230 = scalar_lea.vmem %s0, %s229
      %p231 = pneg %p50
      %p232 = pneg %p47
      %s233 = smul.u32 2, %s20
      %p234 = scmp.lt.s32.totalorder %s19, 1
      %s235 = scalar_select %p234, %s19, 1
      %p236 = scmp.lt.s32.totalorder %s233, 1
      %s237 = scalar_select %p236, %s233, 1
      %s238 = smul.addr %s235, 2
      %s239 = sadd.s32 %s237, %s238
      %s240 = smul.addr %s239, 4
      %s241 = scalar_lea.vmem %s1, %s240
      %p242 = pneg %p78
      %p243 = pneg %p75
      %p244 = scmp.lt.s32.totalorder %s19, 1
      %s245 = scalar_select %p244, %s19, 1
      %s246 = smul.addr %s245, 8
      %s247 = scalar_lea.vmem %s2, %s246
      %p248 = pneg %p104
      %p249 = pneg %p101
      %p250 = scmp.lt.s32.totalorder %s19, 1
      %s251 = scalar_select %p250, %s19, 1
      %s252 = smul.addr %s251, 8
      %s253 = scalar_lea.vmem %s3, %s252
      %p254 = pneg %p130
      %p255 = pneg %p127
      %p256 = pneg %p156
      %p257 = pneg %p153
      %p258 = scmp.lt.s32.totalorder %s19, 1
      %s259 = scalar_select %p258, %s19, 1
      %s260 = smul.addr %s259, 8
      %s261 = scalar_lea.vmem %s4, %s260
      %s262 = smul.u32 2, %s20
      %p263 = scmp.lt.s32.totalorder %s19, 1
      %s264 = scalar_select %p263, %s19, 1
      %p265 = scmp.lt.s32.totalorder %s262, 1
      %s266 = scalar_select %p265, %s262, 1
      %s267 = smul.addr %s264, 2
      %s268 = sadd.s32 %s266, %s267
      %s269 = smul.addr %s268, 4
      %s270 = scalar_lea.vmem %s0, %s269
      %s271 = smul.u32 2, %s20
      %s272 = smul.u32 2, %s20
      %p273 = scmp.lt.s32.totalorder %s19, 1
      %s274 = scalar_select %p273, %s19, 1
      %p275 = scmp.lt.s32.totalorder %s272, 1
      %s276 = scalar_select %p275, %s272, 1
      %s277 = smul.addr %s274, 2
      %s278 = sadd.s32 %s276, %s277
      %s279 = smul.addr %s278, 4
      %s280 = scalar_lea.vmem %s1, %s279
      %s281 = smul.u32 2, %s20
      %p282 = scmp.lt.s32.totalorder %s19, 1
      %s283 = scalar_select %p282, %s19, 1
      %s284 = smul.addr %s283, 8
      %s285 = scalar_lea.vmem %s2, %s284
      %p286 = scmp.lt.s32.totalorder %s19, 1
      %s287 = scalar_select %p286, %s19, 1
      %s288 = smul.addr %s287, 8
      %s289 = scalar_lea.vmem %s3, %s288
      %p290 = scmp.lt.s32.totalorder %s19, 1
      %s291 = scalar_select %p290, %s19, 1
      %s292 = smul.addr %s291, 8
      %s293 = scalar_lea.vmem %s4, %s292
      %p294 = scmp.eq.s32.totalorder %s20, 0
      // Predicated region
      $region37: #{tpu_custom_call.1} parent=35 // pred_check
        %p295 = pneg %p294
      $region38: #{tpu_custom_call.1} parent=35 // pred_check_branch
        %297 = sbr.rel (%p295) target = $region40
      $region39: #{tpu_custom_call.1} parent=35 // pred_region
        %vm298 = vcmask 7168
        %299 = vst.msk [vmem:[#allocation2] sm:$0xff] %vm298, inf
        %300 = vst.msk [vmem:[#allocation3] sm:$0xff] %vm298, 0
      $region40: #{tpu_custom_call.1} parent=35 // pred_fallthru
        _
      %v301 = vld [vmem:[%s270] sm:$0xff]
      %v302 = vld [vmem:[%s285] sm:$0xff]
      %vm303 = vcmp.eq.s32.totalorder %v302, 0
      %v304 = vsel %vm303, 1, 0
      %305 = vset.pattern.permute.xlu0 0
      %306 = vperm.xlu0 %305, %v304
      %v307 = vpop.permute.xlu0 %306
      %vm308 = vcmp.eq.s32.totalorder %v307, 1
      %v310 = vlaneseq
      %v311 = vshrl.u32 %v310, 7
      %v312 = vsub.s32 0, %v311
      %v313 = vrot.slane %v301, %v312
      %v314 = vlaneseq
      %v315 = vshrl.u32 %v314, 7
      %v316 = vsub.s32 4, %v315
      %v317 = vrot.slane %v301, %v316
      %v320 = vlaneseq
      %v321 = vshrl.u32 %v320, 7
      %v322 = vsub.s32 0, %v321
      %v323 = vrot.slane %v313, %v322
      %v324 = vlaneseq
      %v325 = vshrl.u32 %v324, 7
      %v326 = vsub.s32 0, %v325
      %v327 = vrot.slane %v317, %v326
      %v328 = vsel %vm308, %v323, 0.0
      %v329 = vsel %vm308, %v327, 0.0
      %vm330 = vcmp.eq.s32.totalorder %v302, 1
      %v331 = vsel %vm330, 1, 0
      %332 = vset.pattern.permute.xlu0 0
      %333 = vperm.xlu0 %332, %v331
      %v334 = vpop.permute.xlu0 %333
      %vm335 = vcmp.eq.s32.totalorder %v334, 1
      %v336 = vlaneseq
      %v337 = vshrl.u32 %v336, 7
      %v338 = vsub.s32 1, %v337
      %v339 = vrot.slane %v301, %v338
      %v340 = vlaneseq
      %v341 = vshrl.u32 %v340, 7
      %v342 = vsub.s32 5, %v341
      %v343 = vrot.slane %v301, %v342
      %v346 = vlaneseq
      %v347 = vshrl.u32 %v346, 7
      %v348 = vsub.s32 1, %v347
      %v349 = vrot.slane %v339, %v348
      %v350 = vlaneseq
      %v351 = vshrl.u32 %v350, 7
      %v352 = vsub.s32 1, %v351
      %v353 = vrot.slane %v343, %v352
      %v354 = vsel %vm335, %v349, %v328
      %v355 = vsel %vm335, %v353, %v329
      %vm356 = vcmp.eq.s32.totalorder %v302, 2
      %v357 = vsel %vm356, 1, 0
      %358 = vset.pattern.permute.xlu0 0
      %359 = vperm.xlu0 %358, %v357
      %v360 = vpop.permute.xlu0 %359
      %vm361 = vcmp.eq.s32.totalorder %v360, 1
      %v362 = vlaneseq
      %v363 = vshrl.u32 %v362, 7
      %v364 = vsub.s32 2, %v363
      %v365 = vrot.slane %v301, %v364
      %v366 = vlaneseq
      %v367 = vshrl.u32 %v366, 7
      %v368 = vsub.s32 6, %v367
      %v369 = vrot.slane %v301, %v368
      %v372 = vlaneseq
      %v373 = vshrl.u32 %v372, 7
      %v374 = vsub.s32 2, %v373
      %v375 = vrot.slane %v365, %v374
      %v376 = vlaneseq
      %v377 = vshrl.u32 %v376, 7
      %v378 = vsub.s32 2, %v377
      %v379 = vrot.slane %v369, %v378
      %v380 = vsel %vm361, %v375, %v354
      %v381 = vsel %vm361, %v379, %v355
      %vm382 = vcmp.eq.s32.totalorder %v302, 3
      %v383 = vsel %vm382, 1, 0
      %384 = vset.pattern.permute.xlu0 0
      %385 = vperm.xlu0 %384, %v383
      %v386 = vpop.permute.xlu0 %385
      %vm387 = vcmp.eq.s32.totalorder %v386, 1
      %v388 = vlaneseq
      %v389 = vshrl.u32 %v388, 7
      %v390 = vsub.s32 3, %v389
      %v391 = vrot.slane %v301, %v390
      %v392 = vlaneseq
      %v393 = vshrl.u32 %v392, 7
      %v394 = vsub.s32 7, %v393
      %v395 = vrot.slane %v301, %v394
      %v398 = vlaneseq
      %v399 = vshrl.u32 %v398, 7
      %v400 = vsub.s32 3, %v399
      %v401 = vrot.slane %v391, %v400
      %v402 = vlaneseq
      %v403 = vshrl.u32 %v402, 7
      %v404 = vsub.s32 3, %v403
      %v405 = vrot.slane %v395, %v404
      %v406 = vsel %vm387, %v401, %v380
      %v407 = vsel %vm387, %v405, %v381
      %v408 = vxor.u32 %v406, 2147483648
      %v409 = vxor.u32 %v407, 2147483648
      %v410 = vmul.f32 %v408, 1.442695
      %v411 = vpow.pop %v410
      %v412 = vmul.f32 %v409, 1.442695
      %v413 = vpow.pop %v412
      %v414 = vadd.f32 %v411, 1.0
      %v415 = vadd.f32 %v413, 1.0
      %v416 = vrcp.pop %v414
      %v417 = vmul.f32 1.0, %v416
      %v418 = vrcp.pop %v415
      %v419 = vmul.f32 1.0, %v418
      %v420 = vmul.f32 %v417, %v417
      %v421 = vmul.f32 %v419, %v419
      %v422 = vmul.f32 %v420, 0.75
      %v423 = vmul.f32 %v421, 0.75
      %v424 = vsub.f32 1.0, %v417
      %v425 = vsub.f32 1.0, %v419
      %v426 = vadd.f32 %v424, 1e-08
      %v427 = vadd.f32 %v425, 1e-08
      %v428 = vlog2.pop %v426
      %v429 = vmul.f32 %v428, 0.6931472
      %v430 = vlog2.pop %v427
      %v431 = vmul.f32 %v430, 0.6931472
      %v432 = vsub.f32 0.0, %v429
      %v433 = vsub.f32 0.0, %v431
      %v434 = vmul.f32 %v422, %v432
      %v435 = vmul.f32 %v423, %v433
      %v436 = vmul.f32 %v424, %v424
      %v437 = vmul.f32 %v425, %v425
      %v438 = vmul.f32 %v436, 0.25
      %v439 = vmul.f32 %v437, 0.25
      %v440 = vadd.f32 %v417, 1e-08
      %v441 = vadd.f32 %v419, 1e-08
      %v442 = vlog2.pop %v440
      %v443 = vmul.f32 %v442, 0.6931472
      %v444 = vlog2.pop %v441
      %v445 = vmul.f32 %v444, 0.6931472
      %v446 = vsub.f32 0.0, %v443
      %v447 = vsub.f32 0.0, %v445
      %v448 = vmul.f32 %v438, %v446
      %v449 = vmul.f32 %v439, %v447
      %v450 = vsub.f32 %v448, %v434
      %v451 = vsub.f32 %v449, %v435
      %v452 = vld [vmem:[%s280] sm:$0xff]
      %v453 = vld [vmem:[%s289] sm:$0xff]
      %v454 = vmul.f32 %v452, 0.015625
      %v455 = vmul.f32 %v453, 0.015625
      %v457 = vlaneseq
      %v458 = vshrl.u32 %v457, 7
      %v459 = vsub.s32 0, %v458
      %v460 = vrot.slane %v454, %v459
      %v461 = vlaneseq
      %v462 = vshrl.u32 %v461, 7
      %v463 = vsub.s32 4, %v462
      %v464 = vrot.slane %v454, %v463
      %v467 = vlaneseq
      %v468 = vshrl.u32 %v467, 7
      %v469 = vsub.s32 0, %v468
      %v470 = vrot.slane %v460, %v469
      %v471 = vlaneseq
      %v472 = vshrl.u32 %v471, 7
      %v473 = vsub.s32 0, %v472
      %v474 = vrot.slane %v464, %v473
      %476 = vset.pattern.permute.xlu0 0
      %477 = vperm.xlu0 %476, %v455
      %v478 = vpop.permute.xlu0 %477
      %v480 = vsub.f32 %v470, %v478
      %v481 = vsub.f32 %v474, %v478
      %v482 = vand.u32 2147483647, %v480
      %v483 = vand.u32 2147483647, %v481
      %v484 = vadd.f32 %v482, 0.0
      %v485 = vadd.f32 %v483, 0.0
      %v486 = vlaneseq
      %v487 = vshrl.u32 %v486, 7
      %v488 = vsub.s32 1, %v487
      %v489 = vrot.slane %v454, %v488
      %v490 = vlaneseq
      %v491 = vshrl.u32 %v490, 7
      %v492 = vsub.s32 5, %v491
      %v493 = vrot.slane %v454, %v492
      %v496 = vlaneseq
      %v497 = vshrl.u32 %v496, 7
      %v498 = vsub.s32 1, %v497
      %v499 = vrot.slane %v489, %v498
      %v500 = vlaneseq
      %v501 = vshrl.u32 %v500, 7
      %v502 = vsub.s32 1, %v501
      %v503 = vrot.slane %v493, %v502
      %504 = vset.pattern.permute.xlu0 1
      %505 = vperm.xlu0 %504, %v455
      %v506 = vpop.permute.xlu0 %505
      %v508 = vsub.f32 %v499, %v506
      %v509 = vsub.f32 %v503, %v506
      %v510 = vand.u32 2147483647, %v508
      %v511 = vand.u32 2147483647, %v509
      %v512 = vadd.f32 %v484, %v510
      %v513 = vadd.f32 %v485, %v511
      %v514 = vlaneseq
      %v515 = vshrl.u32 %v514, 7
      %v516 = vsub.s32 2, %v515
      %v517 = vrot.slane %v454, %v516
      %v518 = vlaneseq
      %v519 = vshrl.u32 %v518, 7
      %v520 = vsub.s32 6, %v519
      %v521 = vrot.slane %v454, %v520
      %v524 = vlaneseq
      %v525 = vshrl.u32 %v524, 7
      %v526 = vsub.s32 2, %v525
      %v527 = vrot.slane %v517, %v526
      %v528 = vlaneseq
      %v529 = vshrl.u32 %v528, 7
      %v530 = vsub.s32 2, %v529
      %v531 = vrot.slane %v521, %v530
      %532 = vset.pattern.permute.xlu0 2
      %533 = vperm.xlu0 %532, %v455
      %v534 = vpop.permute.xlu0 %533
      %v536 = vsub.f32 %v527, %v534
      %v537 = vsub.f32 %v531, %v534
      %v538 = vand.u32 2147483647, %v536
      %v539 = vand.u32 2147483647, %v537
      %v540 = vadd.f32 %v512, %v538
      %v541 = vadd.f32 %v513, %v539
      %v542 = vlaneseq
      %v543 = vshrl.u32 %v542, 7
      %v544 = vsub.s32 3, %v543
      %v545 = vrot.slane %v454, %v544
      %v546 = vlaneseq
      %v547 = vshrl.u32 %v546, 7
      %v548 = vsub.s32 7, %v547
      %v549 = vrot.slane %v454, %v548
      %v552 = vlaneseq
      %v553 = vshrl.u32 %v552, 7
      %v554 = vsub.s32 3, %v553
      %v555 = vrot.slane %v545, %v554
      %v556 = vlaneseq
      %v557 = vshrl.u32 %v556, 7
      %v558 = vsub.s32 3, %v557
      %v559 = vrot.slane %v549, %v558
      %560 = vset.pattern.permute.xlu0 3
      %561 = vperm.xlu0 %560, %v455
      %v562 = vpop.permute.xlu0 %561
      %v564 = vsub.f32 %v555, %v562
      %v565 = vsub.f32 %v559, %v562
      %v566 = vand.u32 2147483647, %v564
      %v567 = vand.u32 2147483647, %v565
      %v568 = vadd.f32 %v540, %v566
      %v569 = vadd.f32 %v541, %v567
      %v571 = vrot.slane %v452, 6
      %v573 = vsub.f32 %v452, %v571
      %v575 = vrot.slane %v573, 5
      %v576 = vrot.slane %v575, 4
      %v578 = vmul.f32 %v573, %v576
      %580 = vrot.lane.b32.xlu0 %v453, 2
      %v581 = vpop.permute.xlu0 %580
      %v583 = vsub.f32 %v453, %v581
      %585 = vrot.lane.b32.xlu0 %v583, 127
      %v586 = vpop.permute.xlu0 %585
      %v588 = vmul.f32 %v583, %v586
      %v589 = vlaneseq
      %v590 = vshrl.u32 %v589, 7
      %v591 = vsub.s32 2, %v590
      %v592 = vrot.slane %v452, %v591
      %v593 = vlaneseq
      %v594 = vshrl.u32 %v593, 7
      %v595 = vsub.s32 6, %v594
      %v596 = vrot.slane %v452, %v595
      %v599 = vlaneseq
      %v600 = vshrl.u32 %v599, 7
      %v601 = vsub.s32 2, %v600
      %v602 = vrot.slane %v592, %v601
      %v603 = vlaneseq
      %v604 = vshrl.u32 %v603, 7
      %v605 = vsub.s32 2, %v604
      %v606 = vrot.slane %v596, %v605
      %607 = vset.pattern.permute.xlu0 2
      %608 = vperm.xlu0 %607, %v453
      %v609 = vpop.permute.xlu0 %608
      %v611 = vmin.f32 %v602, %v609
      %v612 = vmin.f32 %v606, %v609
      %v613 = vlaneseq
      %v614 = vshrl.u32 %v613, 7
      %v615 = vsub.s32 0, %v614
      %v616 = vrot.slane %v452, %v615
      %v617 = vlaneseq
      %v618 = vshrl.u32 %v617, 7
      %v619 = vsub.s32 4, %v618
      %v620 = vrot.slane %v452, %v619
      %v623 = vlaneseq
      %v624 = vshrl.u32 %v623, 7
      %v625 = vsub.s32 0, %v624
      %v626 = vrot.slane %v616, %v625
      %v627 = vlaneseq
      %v628 = vshrl.u32 %v627, 7
      %v629 = vsub.s32 0, %v628
      %v630 = vrot.slane %v620, %v629
      %631 = vset.pattern.permute.xlu0 0
      %632 = vperm.xlu0 %631, %v453
      %v633 = vpop.permute.xlu0 %632
      %v635 = vmax.f32 %v626, %v633
      %v636 = vmax.f32 %v630, %v633
      %v637 = vsub.f32 %v611, %v635
      %v638 = vsub.f32 %v612, %v636
      %v639 = vmax.f32 %v637, 0.0
      %v640 = vmax.f32 %v638, 0.0
      %v641 = vlaneseq
      %v642 = vshrl.u32 %v641, 7
      %v643 = vsub.s32 3, %v642
      %v644 = vrot.slane %v452, %v643
      %v645 = vlaneseq
      %v646 = vshrl.u32 %v645, 7
      %v647 = vsub.s32 7, %v646
      %v648 = vrot.slane %v452, %v647
      %v651 = vlaneseq
      %v652 = vshrl.u32 %v651, 7
      %v653 = vsub.s32 3, %v652
      %v654 = vrot.slane %v644, %v653
      %v655 = vlaneseq
      %v656 = vshrl.u32 %v655, 7
      %v657 = vsub.s32 3, %v656
      %v658 = vrot.slane %v648, %v657
      %659 = vset.pattern.permute.xlu0 3
      %660 = vperm.xlu0 %659, %v453
      %v661 = vpop.permute.xlu0 %660
      %v663 = vmin.f32 %v654, %v661
      %v664 = vmin.f32 %v658, %v661
      %v665 = vlaneseq
      %v666 = vshrl.u32 %v665, 7
      %v667 = vsub.s32 1, %v666
      %v668 = vrot.slane %v452, %v667
      %v669 = vlaneseq
      %v670 = vshrl.u32 %v669, 7
      %v671 = vsub.s32 5, %v670
      %v672 = vrot.slane %v452, %v671
      %v675 = vlaneseq
      %v676 = vshrl.u32 %v675, 7
      %v677 = vsub.s32 1, %v676
      %v678 = vrot.slane %v668, %v677
      %v679 = vlaneseq
      %v680 = vshrl.u32 %v679, 7
      %v681 = vsub.s32 1, %v680
      %v682 = vrot.slane %v672, %v681
      %683 = vset.pattern.permute.xlu0 1
      %684 = vperm.xlu0 %683, %v453
      %v685 = vpop.permute.xlu0 %684
      %v687 = vmax.f32 %v678, %v685
      %v688 = vmax.f32 %v682, %v685
      %v689 = vsub.f32 %v663, %v687
      %v690 = vsub.f32 %v664, %v688
      %v691 = vmax.f32 %v689, 0.0
      %v692 = vmax.f32 %v690, 0.0
      %v693 = vmul.f32 %v639, %v691
      %v694 = vmul.f32 %v640, %v692
      %v696 = vlaneseq
      %v697 = vshrl.u32 %v696, 7
      %v698 = vsub.s32 2, %v697
      %v699 = vrot.slane %v578, %v698
      %v700 = vlaneseq
      %v701 = vshrl.u32 %v700, 7
      %v702 = vsub.s32 6, %v701
      %v703 = vrot.slane %v578, %v702
      %v706 = vlaneseq
      %v707 = vshrl.u32 %v706, 7
      %v708 = vsub.s32 2, %v707
      %v709 = vrot.slane %v699, %v708
      %v710 = vlaneseq
      %v711 = vshrl.u32 %v710, 7
      %v712 = vsub.s32 2, %v711
      %v713 = vrot.slane %v703, %v712
      %715 = vset.pattern.permute.xlu0 2
      %716 = vperm.xlu0 %715, %v588
      %v717 = vpop.permute.xlu0 %716
      %v719 = vadd.f32 %v709, %v717
      %v720 = vadd.f32 %v713, %v717
      %v721 = vsub.f32 %v719, %v693
      %v722 = vsub.f32 %v720, %v694
      %v723 = vmax.f32 %v721, 1e-06
      %v724 = vmax.f32 %v722, 1e-06
      %v725 = vrcp.pop %v723
      %v726 = vmul.f32 %v693, %v725
      %v727 = vrcp.pop %v724
      %v728 = vmul.f32 %v694, %v727
      %v729 = vmax.f32 %v602, %v609
      %v730 = vmax.f32 %v606, %v609
      %v731 = vmin.f32 %v626, %v633
      %v732 = vmin.f32 %v630, %v633
      %v733 = vsub.f32 %v729, %v731
      %v734 = vsub.f32 %v730, %v732
      %v735 = vmax.f32 %v733, 0.0
      %v736 = vmax.f32 %v734, 0.0
      %v737 = vmax.f32 %v654, %v661
      %v738 = vmax.f32 %v658, %v661
      %v739 = vmin.f32 %v678, %v685
      %v740 = vmin.f32 %v682, %v685
      %v741 = vsub.f32 %v737, %v739
      %v742 = vsub.f32 %v738, %v740
      %v743 = vmax.f32 %v741, 0.0
      %v744 = vmax.f32 %v742, 0.0
      %v745 = vmul.f32 %v735, %v743
      %v746 = vmul.f32 %v736, %v744
      %v747 = vmax.f32 %v745, 1e-06
      %v748 = vmax.f32 %v746, 1e-06
      %v749 = vsub.f32 %v747, %v723
      %v750 = vsub.f32 %v748, %v724
      %v751 = vrcp.pop %v747
      %v752 = vmul.f32 %v749, %v751
      %v753 = vrcp.pop %v748
      %v754 = vmul.f32 %v750, %v753
      %v755 = vsub.f32 %v726, %v752
      %v756 = vsub.f32 %v728, %v754
      %v757 = vsub.f32 0.0, %v755
      %v758 = vsub.f32 0.0, %v756
      %v759 = vadd.f32 %v568, %v450
      %v760 = vadd.f32 %v569, %v451
      %v761 = vadd.f32 %v759, %v757
      %v762 = vadd.f32 %v760, %v758
      %v763 = vlaneseq
      %v764 = vand.u32 %v763, 127
      %v765 = vadd.s32 %v764, 128
      %s766 = smul.u32 %s20, 256
      %v767 = vstv %s766
      %v768 = vadd.s32 %v764, %v767
      %v769 = vadd.s32 %v765, %v767
      %v770 = vmin.f32 %v761, %v762
      %771 = vmin.xlane.f32.xlu0 %v770
      %v772 = vpop.xlane.xlu0 %771
      %vm773 = vcmp.le.f32.partialorder %v761, %v772
      %vm774 = vcmp.le.f32.partialorder %v762, %v772
      %v775 = vsel %vm773, %v768, 256
      %v776 = vsel %vm774, %v769, 256
      %vm777 = vcmp.lt.s32.totalorder %v775, %v776
      %v778 = vsel %vm777, %v775, %v776
      %v779 = vand.u32 %v778, 65535
      %v780 = vshra.s32 %v778, 16
      %v781 = vcvt.s32.f32 %v779
      %v782 = vcvt.s32.f32 %v780
      %783 = vmin.xlane.f32.xlu0 %v782
      %v784 = vpop.xlane.xlu0 %783
      %vm785 = vcmp.eq.f32.partialorder %v782, %v784
      %v786 = vsel %vm785, %v781, inf
      %787 = vmin.xlane.f32.xlu0 %v786
      %v788 = vpop.xlane.xlu0 %787
      %v789 = vcvt.f32.s32 %v788
      %v790 = vcvt.f32.s32 %v784
      %v791 = vshll.u32 %v790, 16
      %v792 = vadd.s32 %v791, %v789
      %v793 = vld [vmem:[#allocation2] sm:$0xff]
      %vm794 = vcmp.lt.f32.partialorder %v772, %v793
      %v795 = vsel %vm794, %v772, %v793
      %vm796 = vcmask 7168
      %797 = vst.msk [vmem:[#allocation2] sm:$0xff] %vm796, %v795
      %v798 = vld [vmem:[#allocation3] sm:$0xff]
      %v799 = vsel %vm794, %v792, %v798
      %800 = vst.msk [vmem:[#allocation3] sm:$0xff] %vm796, %v799
      // Predicated region
      $region41: #{tpu_custom_call.1} parent=35 // pred_check
        %p801 = pneg %p294
      $region42: #{tpu_custom_call.1} parent=35 // pred_check_branch
        %803 = sbr.rel (%p801) target = $region44
      $region43: #{tpu_custom_call.1} parent=35 // pred_region
        %v804 = vld [vmem:[#allocation3] sm:$0xff]
        %805 = vst.msk [vmem:[%s293] sm:$0xff] %vm796, %v804
      $region44: #{tpu_custom_call.1} parent=35 // pred_fallthru
        _
      %p806 = scmp.lt.s32.totalorder %s19, 1
      %s807 = scalar_select %p806, %s19, 1
      %s808 = smul.addr %s807, 8
      %s809 = scalar_lea.vmem %s4, %s808
      // Predicated region
      $region45: #{tpu_custom_call.1} parent=35 // pred_check
        %p810 = pneg %p153
      $region46: #{tpu_custom_call.1} parent=35 // pred_check_branch
        %812 = sbr.rel (%p810) target = $region48
      $region47: #{tpu_custom_call.1} parent=35 // pred_region
        _
      $region48: #{tpu_custom_call.1} parent=35 // pred_fallthru
        _
    $region36: #{tpu_custom_call.1} parent=5 // pred_fallthru
      _
    %p813 = scmp.le.s32.totalorder 2, %s10
    // Predicated region
    $region49: #{tpu_custom_call.1} parent=5 // pred_check
      %p814 = pneg %p813
    $region50: #{tpu_custom_call.1} parent=5 // pred_check_branch
      %816 = sbr.rel (%p814) target = $region52
    $region51: #{tpu_custom_call.1} parent=5 // pred_region
      %s817 = ssub.s32 %s10, 2
      // Predicated region
      $region53: #{tpu_custom_call.1} parent=51 // pred_check
        %p818 = pneg %p159
      $region54: #{tpu_custom_call.1} parent=51 // pred_check_branch
        %820 = sbr.rel (%p818) target = $region56
      $region55: #{tpu_custom_call.1} parent=51 // pred_region
        %p821 = scmp.lt.s32.totalorder %s21, 1
        %s822 = scalar_select %p821, %s21, 1
        %s823 = smul.addr %s822, 8
        %s824 = scalar_lea.vmem %s4, %s823
      $region56: #{tpu_custom_call.1} parent=51 // pred_fallthru
        _
    $region52: #{tpu_custom_call.1} parent=5 // pred_fallthru
      _
  $region6: #{tpu_custom_call.1} parent=0 // loop_footer
    %s14 = sadd.s32 1, %s10
  $region7: #{tpu_custom_call.1} parent=0 // loop_footer_branch
    %9 = sbr.rel target = $region3
  $region8: #{tpu_custom_call.1} parent=0 // loop_exit
    _

</llo_original>
